<compile_context>
chip_gen: v7x
topology: tpu7x:2x2x1
jax: 0.10.0
libtpu: 0.0.40
codegen_flags: <defaults>
</compile_context>

<pallas_src>
import jax
import jax.numpy as jnp
from jax.experimental import pallas as pl
from jax.experimental.pallas import tpu as pltpu


def _mlp_kernel(x_ref, w1_ref, b1_ref, w2_ref, b2_ref, w3_ref, b3_ref, o_ref):
    # Layer 1 on the MXU: cast x to bf16 here (VPU has huge slack; avoids an
    # extra HBM pass in the wrapper), f32 accumulation, bias/ReLU in f32.
    x = x_ref[...].astype(jnp.bfloat16)
    h1 = jnp.dot(x, w1_ref[...], preferred_element_type=jnp.float32)
    h1 = jnp.maximum(h1 + b1_ref[...], 0.0)                       # (tb, 64)
    # Dropout(0.3): identity at inference time.

    # Layer 2 (tiny, VMEM-resident operands) in f32 on the MXU.
    h2 = jnp.dot(h1, w2_ref[...], preferred_element_type=jnp.float32)
    h2 = jnp.maximum(h2 + b2_ref[...], 0.0)                       # (tb, 32)

    # Layer 3: N=1 "matmul" done as VPU multiply + XLU lane reduce
    # (w3 is passed pre-reshaped to (1, 32)).
    logits = jnp.sum(h2 * w3_ref[...], axis=-1, keepdims=True) + b3_ref[...]

    # Sigmoid: exp on the EUP, exact reciprocal (mem-bound kernel -> free).
    o_ref[...] = pl.reciprocal(1.0 + jnp.exp(-logits), approx=False)


def _round_up(n, m):
    return ((n + m - 1) // m) * m


def _vmem_limit_bytes():
    """Generation-aware scoped-VMEM limit (leave headroom for compiler scratch)."""
    try:
        physical = pltpu.get_tpu_info().vmem_capacity_bytes
    except Exception:
        physical = 64 * 1024 * 1024  # conservative: v7x per-TensorCore VMEM
    # ~3/4 of physical, capped at 96 MiB (v5e/v6e have 128 MiB physical).
    return min(int(physical) * 3 // 4, 96 * 1024 * 1024)


def _pick_block_b(B, D, x_itemsize, requested, budget):
    """Batch tile: as big as VMEM allows, but keep >= ~4 grid steps so
    double-buffering hides the x DMA and v7x's 2 TCs both get work."""
    tb = 4096 if requested is None else requested
    tb = min(tb, _round_up(B, 8))
    tb = max(8, _round_up(tb, 8))

    def vmem_bytes(t):
        return (2 * t * D * x_itemsize     # x tile (native dtype), double-buffered
                + 2 * D * 64 * 2           # w1 (bf16); worst case double-buffered
                + 2 * t * 128 * 4          # (tb,1) out window, lane-padded, dbl-buffered
                + t * (64 + 32) * 4        # h1 / h2 f32 intermediates
                + (2 << 20))               # slack: biases, w2/w3, compiler scratch

    while tb > 8 and vmem_bytes(tb) > budget:
        tb = max(8, _round_up(tb // 2, 8))

    if requested is None:
        min_steps = 4
        if B >= min_steps * 8:
            tb = min(tb, max(8, _round_up(-(-B // min_steps), 8)))
    return tb


def _build_and_call(x, w1_bf, b1, w2, b2, w3_row, b3, tb, vmem_limit,
                    *, buffered_weights):
    B, D = x.shape
    H1 = w1_bf.shape[1]   # 64
    H2 = w2.shape[1]      # 32
    O = b3.shape[1]       # 1
    grid = (pl.cdiv(B, tb),)

    def const(shape):
        # Constant-resident operand: index_map never changes, so one buffer
        # suffices (halves its VMEM footprint -> more room for the x tile).
        if buffered_weights:
            return pl.BlockSpec(shape, lambda i: (0, 0),
                                pipeline_mode=pl.Buffered(1))
        return pl.BlockSpec(shape, lambda i: (0, 0))

    cost = pl.CostEstimate(
        flops=2 * B * (D * H1 + H1 * H2 + H2 * O),
        transcendentals=B * O,
        bytes_accessed=(B * D * x.dtype.itemsize   # x (native dtype)
                        + D * H1 * 2               # w1 (bf16)
                        + H1 * H2 * 4 + H2 * O * 4
                        + (H1 + H2 + O) * 4        # biases
                        + B * O * 4),              # output
    )

    return pl.pallas_call(
        _mlp_kernel,
        out_shape=jax.ShapeDtypeStruct((B, O), jnp.float32),
        grid_spec=pltpu.PrefetchScalarGridSpec(
            num_scalar_prefetch=0,
            grid=grid,
            in_specs=[
                pl.BlockSpec((tb, D), lambda i: (i, 0)),   # x tile (pipelined)
                const((D, H1)),
                const((1, H1)),
                const((H1, H2)),
                const((1, H2)),
                const((1, H2)),   # w3 as a row vector
                const((1, O)),
            ],
            out_specs=pl.BlockSpec((tb, O), lambda i: (i, 0)),
        ),
        compiler_params=pltpu.CompilerParams(
            dimension_semantics=("parallel",),   # shard batch tiles across v7x TCs
            vmem_limit_bytes=vmem_limit,
        ),
        cost_estimate=cost,
    )(x, w1_bf, b1, w2, b2, w3_row, b3)


def lofi_classifier_forward(x, params, *, block_b=None):
    """x: [B, input_dim] (f32 or bf16) -> [B, 1] float32 sigmoid probabilities."""
    w1, b1, w2, b2, w3, b3 = params
    B, D = x.shape
    H2 = w2.shape[1]

    vmem_limit = _vmem_limit_bytes()
    budget = vmem_limit - (4 << 20)
    tb = _pick_block_b(B, D, x.dtype.itemsize, block_b, budget)

    # Weights are tiny: casting w1 to bf16 here is negligible traffic and
    # halves its resident VMEM footprint. x is NOT cast or padded in the
    # wrapper (that would add a full extra HBM pass over the dominant
    # operand); ragged B is handled by the grid's partial last block.
    w1_bf = w1.astype(jnp.bfloat16)
    w3_row = w3.reshape(1, H2)   # (32,1) -> (1,32) for the VPU mul+reduce

    args = (x, w1_bf, b1, w2, b2, w3_row, b3)
    try:
        return _build_and_call(*args, tb, vmem_limit, buffered_weights=True)
    except Exception:
        # pl.Buffered(1) residency is an optimization only; fall back to the
        # default double-buffered pipeline if this build rejects it.
        return _build_and_call(*args, tb, vmem_limit, buffered_weights=False)


def init_params(key, input_dim):
    """Deterministic init mimicking PyTorch Linear default (U(-1/sqrt(fan_in), +))."""
    dims = [(input_dim, 64), (64, 32), (32, 1)]
    params = []
    for i, (fan_in, fan_out) in enumerate(dims):
        kw, kb = jax.random.split(jax.random.fold_in(key, i))
        bound = 1.0 / jnp.sqrt(jnp.float32(fan_in))
        w = jax.random.uniform(kw, (fan_in, fan_out), jnp.float32, -bound, bound)
        b = jax.random.uniform(kb, (1, fan_out), jnp.float32, -bound, bound)
        params += [w, b]
    return tuple(params)


def _reference(x, params, *, match_kernel_precision=True):
    w1, b1, w2, b2, w3, b3 = params
    if match_kernel_precision:
        h1 = jnp.dot(x.astype(jnp.bfloat16), w1.astype(jnp.bfloat16),
                     preferred_element_type=jnp.float32)
    else:
        h1 = x @ w1
    h1 = jnp.maximum(h1 + b1, 0.0)
    h2 = jnp.maximum(h1 @ w2 + b2, 0.0)
    return jax.nn.sigmoid(h2 @ w3 + b3)


if __name__ == "__main__":
    key = jax.random.PRNGKey(0)
    B, INPUT_DIM = 8, 32

    kx, kp = jax.random.split(key)
    x = jax.random.normal(kx, (B, INPUT_DIM), jnp.float32)
    params = init_params(kp, INPUT_DIM)

    out = jax.block_until_ready(lofi_classifier_forward(x, params))
    assert out.shape == (B, 1)

    # Reference matching the kernel's bf16 first matmul.
    ref_bf16 = _reference(x, params, match_kernel_precision=True)
    assert jnp.allclose(out, ref_bf16, atol=5e-3, rtol=0.0), (
        float(jnp.max(jnp.abs(out - ref_bf16))))

    # Coarse check against the pure-f32 PyTorch-equivalent forward.
    ref_f32 = _reference(x, params, match_kernel_precision=False)
    assert jnp.allclose(out, ref_f32, atol=5e-2, rtol=0.0), (
        float(jnp.max(jnp.abs(out - ref_f32))))

    print("KERNEL_OK")
</pallas_src>

<mosaic_0001>
module attributes {stable_mosaic.version = 11 : i64} {
  func.func @_mlp_kernel(%arg0: i32, %arg1: memref<8x32xf32, #tpu.memory_space<vmem>>, %arg2: memref<32x64xbf16, #tpu.memory_space<vmem>>, %arg3: memref<1x64xf32, #tpu.memory_space<vmem>>, %arg4: memref<64x32xf32, #tpu.memory_space<vmem>>, %arg5: memref<1x32xf32, #tpu.memory_space<vmem>>, %arg6: memref<1x32xf32, #tpu.memory_space<vmem>>, %arg7: memref<1x1xf32, #tpu.memory_space<vmem>>, %arg8: memref<8x1xf32, #tpu.memory_space<vmem>>) attributes {dimension_semantics = [#tpu.dimension_semantics<parallel>], iteration_bounds = array<i64: 1>, scalar_prefetch = 0 : i64, scratch_operands = 0 : i64, tpu.core_type = #tpu.core_type<tc>, window_params = [{transform_indices = @transform_0, window_bounds = array<i64: 8, 32>}, {pipeline_mode = #tpu.pipeline_mode<synchronous>, transform_indices = @transform_1, window_bounds = array<i64: 32, 64>}, {pipeline_mode = #tpu.pipeline_mode<synchronous>, transform_indices = @transform_2, window_bounds = array<i64: 1, 64>}, {pipeline_mode = #tpu.pipeline_mode<synchronous>, transform_indices = @transform_3, window_bounds = array<i64: 64, 32>}, {pipeline_mode = #tpu.pipeline_mode<synchronous>, transform_indices = @transform_4, window_bounds = array<i64: 1, 32>}, {pipeline_mode = #tpu.pipeline_mode<synchronous>, transform_indices = @transform_5, window_bounds = array<i64: 1, 32>}, {pipeline_mode = #tpu.pipeline_mode<synchronous>, transform_indices = @transform_6, window_bounds = array<i64: 1, 1>}, {transform_indices = @transform_7, window_bounds = array<i64: 8, 1>}]} {
    %c0 = arith.constant 0 : index
    %c0_0 = arith.constant 0 : index
    %0 = vector.load %arg1[%c0, %c0_0] : memref<8x32xf32, #tpu.memory_space<vmem>>, vector<8x32xf32>
    %1 = arith.truncf %0 : vector<8x32xf32> to vector<8x32xbf16>
    %c0_1 = arith.constant 0 : index
    %c0_2 = arith.constant 0 : index
    %2 = vector.load %arg2[%c0_1, %c0_2] : memref<32x64xbf16, #tpu.memory_space<vmem>>, vector<32x64xbf16>
    %cst = arith.constant dense<0.000000e+00> : vector<8x64xf32>
    %3 = tpu.matmul %1, %2, %cst {dimension_numbers = #tpu.dot_dimension_numbers<[1], [0], [0], [1], [0, 0, 1, 1], [], []>} : vector<8x32xbf16>, vector<32x64xbf16>, vector<8x64xf32> -> vector<8x64xf32>
    %c0_3 = arith.constant 0 : index
    %c0_4 = arith.constant 0 : index
    %4 = vector.load %arg3[%c0_3, %c0_4] : memref<1x64xf32, #tpu.memory_space<vmem>>, vector<1x64xf32>
    %5 = vector.broadcast %4 : vector<1x64xf32> to vector<8x64xf32>
    %6 = arith.addf %3, %5 : vector<8x64xf32>
    %cst_5 = arith.constant 0.000000e+00 : f32
    %7 = vector.broadcast %cst_5 : f32 to vector<8x64xf32>
    %8 = arith.maximumf %6, %7 : vector<8x64xf32>
    %c0_6 = arith.constant 0 : index
    %c0_7 = arith.constant 0 : index
    %9 = vector.load %arg4[%c0_6, %c0_7] : memref<64x32xf32, #tpu.memory_space<vmem>>, vector<64x32xf32>
    %cst_8 = arith.constant dense<0.000000e+00> : vector<8x32xf32>
    %10 = tpu.matmul %8, %9, %cst_8 {dimension_numbers = #tpu.dot_dimension_numbers<[1], [0], [0], [1], [0, 0, 1, 1], [], []>} : vector<8x64xf32>, vector<64x32xf32>, vector<8x32xf32> -> vector<8x32xf32>
    %c0_9 = arith.constant 0 : index
    %c0_10 = arith.constant 0 : index
    %11 = vector.load %arg5[%c0_9, %c0_10] : memref<1x32xf32, #tpu.memory_space<vmem>>, vector<1x32xf32>
    %12 = vector.broadcast %11 : vector<1x32xf32> to vector<8x32xf32>
    %13 = arith.addf %10, %12 : vector<8x32xf32>
    %cst_11 = arith.constant 0.000000e+00 : f32
    %14 = vector.broadcast %cst_11 : f32 to vector<8x32xf32>
    %15 = arith.maximumf %13, %14 : vector<8x32xf32>
    %c0_12 = arith.constant 0 : index
    %c0_13 = arith.constant 0 : index
    %16 = vector.load %arg6[%c0_12, %c0_13] : memref<1x32xf32, #tpu.memory_space<vmem>>, vector<1x32xf32>
    %17 = vector.broadcast %16 : vector<1x32xf32> to vector<8x32xf32>
    %18 = arith.mulf %15, %17 : vector<8x32xf32>
    %cst_14 = arith.constant dense<0.000000e+00> : vector<8xf32>
    %19 = vector.multi_reduction <add>, %18, %cst_14 [1] : vector<8x32xf32> to vector<8xf32>
    %20 = vector.shape_cast %19 : vector<8xf32> to vector<8x1xf32>
    %c0_15 = arith.constant 0 : index
    %c0_16 = arith.constant 0 : index
    %21 = vector.load %arg7[%c0_15, %c0_16] : memref<1x1xf32, #tpu.memory_space<vmem>>, vector<1x1xf32>
    %22 = vector.broadcast %21 : vector<1x1xf32> to vector<8x1xf32>
    %23 = arith.addf %20, %22 : vector<8x1xf32>
    %cst_17 = arith.constant 0.000000e+00 : f32
    %24 = vector.broadcast %cst_17 : f32 to vector<8x1xf32>
    %25 = arith.subf %24, %23 : vector<8x1xf32>
    %26 = math.exp %25 : vector<8x1xf32>
    %cst_18 = arith.constant 1.000000e+00 : f32
    %27 = vector.broadcast %cst_18 : f32 to vector<8x1xf32>
    %28 = arith.addf %27, %26 : vector<8x1xf32>
    %29 = tpu.reciprocal %28 : vector<8x1xf32> -> vector<8x1xf32>
    %c0_19 = arith.constant 0 : index
    %c0_20 = arith.constant 0 : index
    %30 = vector.load %arg8[%c0_19, %c0_20] : memref<8x1xf32, #tpu.memory_space<vmem>>, vector<8x1xf32>
    tpu.vector_store %arg8[%c0_19, %c0_20], %29 {strides = array<i32>} : memref<8x1xf32, #tpu.memory_space<vmem>>, vector<8x1xf32>,
    return
  }
  func.func @transform_0(%arg0: i32) -> (i32, i32) {
    %c0_i32 = arith.constant 0 : i32
    %c0_i32_0 = arith.constant 0 : i32
    return %arg0, %c0_i32 : i32, i32
  }
  func.func @transform_1(%arg0: i32) -> (i32, i32) {
    %c0_i32 = arith.constant 0 : i32
    %c0_i32_0 = arith.constant 0 : i32
    %c0_i32_1 = arith.constant 0 : i32
    return %c0_i32, %c0_i32_0 : i32, i32
  }
  func.func @transform_2(%arg0: i32) -> (i32, i32) {
    %c0_i32 = arith.constant 0 : i32
    %c0_i32_0 = arith.constant 0 : i32
    %c0_i32_1 = arith.constant 0 : i32
    return %c0_i32, %c0_i32_0 : i32, i32
  }
  func.func @transform_3(%arg0: i32) -> (i32, i32) {
    %c0_i32 = arith.constant 0 : i32
    %c0_i32_0 = arith.constant 0 : i32
    %c0_i32_1 = arith.constant 0 : i32
    return %c0_i32, %c0_i32_0 : i32, i32
  }
  func.func @transform_4(%arg0: i32) -> (i32, i32) {
    %c0_i32 = arith.constant 0 : i32
    %c0_i32_0 = arith.constant 0 : i32
    %c0_i32_1 = arith.constant 0 : i32
    return %c0_i32, %c0_i32_0 : i32, i32
  }
  func.func @transform_5(%arg0: i32) -> (i32, i32) {
    %c0_i32 = arith.constant 0 : i32
    %c0_i32_0 = arith.constant 0 : i32
    %c0_i32_1 = arith.constant 0 : i32
    return %c0_i32, %c0_i32_0 : i32, i32
  }
  func.func @transform_6(%arg0: i32) -> (i32, i32) {
    %c0_i32 = arith.constant 0 : i32
    %c0_i32_0 = arith.constant 0 : i32
    %c0_i32_1 = arith.constant 0 : i32
    return %c0_i32, %c0_i32_0 : i32, i32
  }
  func.func @transform_7(%arg0: i32) -> (i32, i32) {
    %c0_i32 = arith.constant 0 : i32
    %c0_i32_0 = arith.constant 0 : i32
    return %arg0, %c0_i32 : i32, i32
  }
}

module attributes {stable_mosaic.version = 11 : i64} {
  func.func @_mlp_kernel(%arg0: i32, %arg1: memref<8x32xf32, #tpu.memory_space<vmem>>, %arg2: memref<32x64xbf16, #tpu.memory_space<vmem>>, %arg3: memref<1x64xf32, #tpu.memory_space<vmem>>, %arg4: memref<64x32xf32, #tpu.memory_space<vmem>>, %arg5: memref<1x32xf32, #tpu.memory_space<vmem>>, %arg6: memref<1x32xf32, #tpu.memory_space<vmem>>, %arg7: memref<1x1xf32, #tpu.memory_space<vmem>>, %arg8: memref<8x1xf32, #tpu.memory_space<vmem>>) attributes {dimension_semantics = [#tpu.dimension_semantics<parallel>], iteration_bounds = array<i64: 1>, scalar_prefetch = 0 : i64, scratch_operands = 0 : i64, tpu.core_type = #tpu.core_type<tc>, window_params = [{transform_indices = @transform_0, window_bounds = array<i64: 8, 32>}, {pipeline_mode = #tpu.pipeline_mode<synchronous>, transform_indices = @transform_1, window_bounds = array<i64: 32, 64>}, {pipeline_mode = #tpu.pipeline_mode<synchronous>, transform_indices = @transform_2, window_bounds = array<i64: 1, 64>}, {pipeline_mode = #tpu.pipeline_mode<synchronous>, transform_indices = @transform_3, window_bounds = array<i64: 64, 32>}, {pipeline_mode = #tpu.pipeline_mode<synchronous>, transform_indices = @transform_4, window_bounds = array<i64: 1, 32>}, {pipeline_mode = #tpu.pipeline_mode<synchronous>, transform_indices = @transform_5, window_bounds = array<i64: 1, 32>}, {pipeline_mode = #tpu.pipeline_mode<synchronous>, transform_indices = @transform_6, window_bounds = array<i64: 1, 1>}, {transform_indices = @transform_7, window_bounds = array<i64: 8, 1>}]} {
    %c0 = arith.constant 0 : index
    %c0_0 = arith.constant 0 : index
    %0 = vector.load %arg1[%c0, %c0_0] : memref<8x32xf32, #tpu.memory_space<vmem>>, vector<8x32xf32>
    %1 = arith.truncf %0 : vector<8x32xf32> to vector<8x32xbf16>
    %c0_1 = arith.constant 0 : index
    %c0_2 = arith.constant 0 : index
    %2 = vector.load %arg2[%c0_1, %c0_2] : memref<32x64xbf16, #tpu.memory_space<vmem>>, vector<32x64xbf16>
    %cst = arith.constant dense<0.000000e+00> : vector<8x64xf32>
    %3 = tpu.matmul %1, %2, %cst {dimension_numbers = #tpu.dot_dimension_numbers<[1], [0], [0], [1], [0, 0, 1, 1], [], []>} : vector<8x32xbf16>, vector<32x64xbf16>, vector<8x64xf32> -> vector<8x64xf32>
    %c0_3 = arith.constant 0 : index
    %c0_4 = arith.constant 0 : index
    %4 = vector.load %arg3[%c0_3, %c0_4] : memref<1x64xf32, #tpu.memory_space<vmem>>, vector<1x64xf32>
    %5 = vector.broadcast %4 : vector<1x64xf32> to vector<8x64xf32>
    %6 = arith.addf %3, %5 : vector<8x64xf32>
    %cst_5 = arith.constant 0.000000e+00 : f32
    %7 = vector.broadcast %cst_5 : f32 to vector<8x64xf32>
    %8 = arith.maximumf %6, %7 : vector<8x64xf32>
    %c0_6 = arith.constant 0 : index
    %c0_7 = arith.constant 0 : index
    %9 = vector.load %arg4[%c0_6, %c0_7] : memref<64x32xf32, #tpu.memory_space<vmem>>, vector<64x32xf32>
    %cst_8 = arith.constant dense<0.000000e+00> : vector<8x32xf32>
    %10 = tpu.matmul %8, %9, %cst_8 {dimension_numbers = #tpu.dot_dimension_numbers<[1], [0], [0], [1], [0, 0, 1, 1], [], []>} : vector<8x64xf32>, vector<64x32xf32>, vector<8x32xf32> -> vector<8x32xf32>
    %c0_9 = arith.constant 0 : index
    %c0_10 = arith.constant 0 : index
    %11 = vector.load %arg5[%c0_9, %c0_10] : memref<1x32xf32, #tpu.memory_space<vmem>>, vector<1x32xf32>
    %12 = vector.broadcast %11 : vector<1x32xf32> to vector<8x32xf32>
    %13 = arith.addf %10, %12 : vector<8x32xf32>
    %cst_11 = arith.constant 0.000000e+00 : f32
    %14 = vector.broadcast %cst_11 : f32 to vector<8x32xf32>
    %15 = arith.maximumf %13, %14 : vector<8x32xf32>
    %c0_12 = arith.constant 0 : index
    %c0_13 = arith.constant 0 : index
    %16 = vector.load %arg6[%c0_12, %c0_13] : memref<1x32xf32, #tpu.memory_space<vmem>>, vector<1x32xf32>
    %17 = vector.broadcast %16 : vector<1x32xf32> to vector<8x32xf32>
    %18 = arith.mulf %15, %17 : vector<8x32xf32>
    %cst_14 = arith.constant dense<0.000000e+00> : vector<8xf32>
    %19 = vector.multi_reduction <add>, %18, %cst_14 [1] : vector<8x32xf32> to vector<8xf32>
    %20 = vector.shape_cast %19 : vector<8xf32> to vector<8x1xf32>
    %c0_15 = arith.constant 0 : index
    %c0_16 = arith.constant 0 : index
    %21 = vector.load %arg7[%c0_15, %c0_16] : memref<1x1xf32, #tpu.memory_space<vmem>>, vector<1x1xf32>
    %22 = vector.broadcast %21 : vector<1x1xf32> to vector<8x1xf32>
    %23 = arith.addf %20, %22 : vector<8x1xf32>
    %cst_17 = arith.constant 0.000000e+00 : f32
    %24 = vector.broadcast %cst_17 : f32 to vector<8x1xf32>
    %25 = arith.subf %24, %23 : vector<8x1xf32>
    %26 = math.exp %25 : vector<8x1xf32>
    %cst_18 = arith.constant 1.000000e+00 : f32
    %27 = vector.broadcast %cst_18 : f32 to vector<8x1xf32>
    %28 = arith.addf %27, %26 : vector<8x1xf32>
    %29 = tpu.reciprocal %28 : vector<8x1xf32> -> vector<8x1xf32>
    %c0_19 = arith.constant 0 : index
    %c0_20 = arith.constant 0 : index
    %30 = vector.load %arg8[%c0_19, %c0_20] : memref<8x1xf32, #tpu.memory_space<vmem>>, vector<8x1xf32>
    tpu.vector_store %arg8[%c0_19, %c0_20], %29 {strides = array<i32>} : memref<8x1xf32, #tpu.memory_space<vmem>>, vector<8x1xf32>,
    return
  }
  func.func @transform_0(%arg0: i32) -> (i32, i32) {
    %c0_i32 = arith.constant 0 : i32
    %c0_i32_0 = arith.constant 0 : i32
    return %arg0, %c0_i32 : i32, i32
  }
  func.func @transform_1(%arg0: i32) -> (i32, i32) {
    %c0_i32 = arith.constant 0 : i32
    %c0_i32_0 = arith.constant 0 : i32
    %c0_i32_1 = arith.constant 0 : i32
    return %c0_i32, %c0_i32_0 : i32, i32
  }
  func.func @transform_2(%arg0: i32) -> (i32, i32) {
    %c0_i32 = arith.constant 0 : i32
    %c0_i32_0 = arith.constant 0 : i32
    %c0_i32_1 = arith.constant 0 : i32
    return %c0_i32, %c0_i32_0 : i32, i32
  }
  func.func @transform_3(%arg0: i32) -> (i32, i32) {
    %c0_i32 = arith.constant 0 : i32
    %c0_i32_0 = arith.constant 0 : i32
    %c0_i32_1 = arith.constant 0 : i32
    return %c0_i32, %c0_i32_0 : i32, i32
  }
  func.func @transform_4(%arg0: i32) -> (i32, i32) {
    %c0_i32 = arith.constant 0 : i32
    %c0_i32_0 = arith.constant 0 : i32
    %c0_i32_1 = arith.constant 0 : i32
    return %c0_i32, %c0_i32_0 : i32, i32
  }
  func.func @transform_5(%arg0: i32) -> (i32, i32) {
    %c0_i32 = arith.constant 0 : i32
    %c0_i32_0 = arith.constant 0 : i32
    %c0_i32_1 = arith.constant 0 : i32
    return %c0_i32, %c0_i32_0 : i32, i32
  }
  func.func @transform_6(%arg0: i32) -> (i32, i32) {
    %c0_i32 = arith.constant 0 : i32
    %c0_i32_0 = arith.constant 0 : i32
    %c0_i32_1 = arith.constant 0 : i32
    return %c0_i32, %c0_i32_0 : i32, i32
  }
  func.func @transform_7(%arg0: i32) -> (i32, i32) {
    %c0_i32 = arith.constant 0 : i32
    %c0_i32_0 = arith.constant 0 : i32
    return %arg0, %c0_i32 : i32, i32
  }
}

</mosaic_0001>

<llo_original>
// kernel: tpu_custom_call.1
$region0: #{tpu_custom_call.1}
  #allocation0 [shape = 'u32[]', space=smem, size = 0x4, offset = 0x4, fixed_abs, tag = 'smem constant byte address 0x4 - core index']
  #allocation1 [shape = 'u32[144,128]{1,0:T(1,128)}', space=vmem, size = 0x12000, scoped, tag = 'internal scratch']
  #allocation2 [shape = 'f32[1,1]{1,0:T(1,128)S(1)}', space=vmem, size = 0x200, scoped, tag = 'scoped memory for tpu_custom_call.1']
  %s0 = inlined_call_operand.vmem [shape: f32[8,32], index: 0, kind: input, shape index: {}]
  %s1 = inlined_call_operand.vmem [shape: bf16[32,64], index: 1, kind: input, shape index: {}]
  %s2 = inlined_call_operand.vmem [shape: f32[1,64], index: 2, kind: input, shape index: {}]
  %s3 = inlined_call_operand.vmem [shape: f32[64,32], index: 3, kind: input, shape index: {}]
  %s4 = inlined_call_operand.vmem [shape: f32[1,32], index: 4, kind: input, shape index: {}]
  %s5 = inlined_call_operand.vmem [shape: f32[1,32], index: 5, kind: input, shape index: {}]
  %s6 = inlined_call_operand.<no memory space> [shape: f32[1,1], index: 6, kind: input, shape index: {}]
  %s7 = inlined_call_operand.vmem [shape: f32[8,1], index: 7, kind: output, shape index: {}]
  %s8 = sld [smem:[#allocation0]]
  $region38: #{tpu_custom_call.1} parent=0
    _
  %s10 = ssub.s32 1, %s8
  %s11 = scalar_select 0, %s10, %s8
  %v12 = vstv %s6
  %13 = vst [vmem:[#allocation2] sm:$0x1] %v12
  // Predicated region
  $region2: #{tpu_custom_call.1} parent=0 // pred_check
    _
  $region3: #{tpu_custom_call.1} parent=0 // pred_check_branch
    %15 = sbr.rel (0) target = $region5
  $region4: #{tpu_custom_call.1} parent=0 // pred_region
    _
  $region5: #{tpu_custom_call.1} parent=0 // pred_fallthru
    _
  // Predicated region
  $region6: #{tpu_custom_call.1} parent=0 // pred_check
    _
  $region7: #{tpu_custom_call.1} parent=0 // pred_check_branch
    %17 = sbr.rel (0) target = $region9
  $region8: #{tpu_custom_call.1} parent=0 // pred_region
    _
  $region9: #{tpu_custom_call.1} parent=0 // pred_fallthru
    _
  // Predicated region
  $region10: #{tpu_custom_call.1} parent=0 // pred_check
    _
  $region11: #{tpu_custom_call.1} parent=0 // pred_check_branch
    %19 = sbr.rel (0) target = $region13
  $region12: #{tpu_custom_call.1} parent=0 // pred_region
    _
  $region13: #{tpu_custom_call.1} parent=0 // pred_fallthru
    _
  // Predicated region
  $region14: #{tpu_custom_call.1} parent=0 // pred_check
    _
  $region15: #{tpu_custom_call.1} parent=0 // pred_check_branch
    %21 = sbr.rel (0) target = $region17
  $region16: #{tpu_custom_call.1} parent=0 // pred_region
    _
  $region17: #{tpu_custom_call.1} parent=0 // pred_fallthru
    _
  // Predicated region
  $region18: #{tpu_custom_call.1} parent=0 // pred_check
    _
  $region19: #{tpu_custom_call.1} parent=0 // pred_check_branch
    %23 = sbr.rel (0) target = $region21
  $region20: #{tpu_custom_call.1} parent=0 // pred_region
    _
  $region21: #{tpu_custom_call.1} parent=0 // pred_fallthru
    _
  // Predicated region
  $region22: #{tpu_custom_call.1} parent=0 // pred_check
    _
  $region23: #{tpu_custom_call.1} parent=0 // pred_check_branch
    %25 = sbr.rel (0) target = $region25
  $region24: #{tpu_custom_call.1} parent=0 // pred_region
    _
  $region25: #{tpu_custom_call.1} parent=0 // pred_fallthru
    _
  // Predicated region
  $region26: #{tpu_custom_call.1} parent=0 // pred_check
    _
  $region27: #{tpu_custom_call.1} parent=0 // pred_check_branch
    %27 = sbr.rel (0) target = $region29
  $region28: #{tpu_custom_call.1} parent=0 // pred_region
    _
  $region29: #{tpu_custom_call.1} parent=0 // pred_fallthru
    _
  %v29 = vld [vmem:[%s0] sm:$0xff]
  %v30 = vpack.c.bf16 %v29, %v29
  %v31 = vld [vmem:[%s1] sm:$0xf]
  %v32 = vld [vmem:[%s1 + $0x4] sm:$0xf]
  %v33 = vld [vmem:[%s1 + $0x8] sm:$0xf]
  %v34 = vld [vmem:[%s1 + $0xc] sm:$0xf]
  %v35 = vld [vmem:[%s2] sm:$0x1]
  %v37 = vlaneseq
  %v38 = vshrl.u32 %v37, 7
  %v39 = vsub.s32 0, %v38
  %v40 = vrot.slane %v35, %v39
  %v46 = vunpack.c.l.b16 %v31
  %v47 = vunpack.c.l.b16 %v32
  %v48 = vunpack.c.l.b16 %v33
  %v49 = vunpack.c.l.b16 %v34
  %v50 = vpack.c.b16 %v47, %v46
  %v51 = vpack.c.b16 %v49, %v48
  %vm54 = vcmask 261120
  %v56 = vsel %vm54, %v30, 0
  %58 = vmatprep.subr.bf16.mxu0 0
  %59 = vmatpush1.bf16.msra.mxu0 %v50
  %60 = vmatprep.subr.bf16.mxu0 0
  %61 = vmatpush1.bf16.msra.mxu0 %v51
  %62 = vmatprep.subr.bf16.mxu0 0
  %63 = vmatpush1.bf16.msra.mxu0 0
  %64 = vmatprep.subr.bf16.mxu0 0
  %65 = vmatpush1.bf16.msra.mxu0 0
  %66 = vmatprep.subr.bf16.mxu0 0
  %67 = vmatpush1.bf16.msra.mxu0 0
  %68 = vmatprep.subr.bf16.mxu0 0
  %69 = vmatpush1.bf16.msra.mxu0 0
  %70 = vmatprep.subr.bf16.mxu0 0
  %71 = vmatpush1.bf16.msra.mxu0 0
  %72 = vmatprep.subr.bf16.mxu0 0
  %73 = vmatpush1.bf16.msra.mxu0 0
  %74 = vmatprep.subr.bf16.mxu0 0
  %75 = vmatpush1.bf16.msra.mxu0 0
  %76 = vmatprep.subr.bf16.mxu0 0
  %77 = vmatpush1.bf16.msra.mxu0 0
  %78 = vmatprep.subr.bf16.mxu0 0
  %79 = vmatpush1.bf16.msra.mxu0 0
  %80 = vmatprep.subr.bf16.mxu0 0
  %81 = vmatpush1.bf16.msra.mxu0 0
  %82 = vmatprep.subr.bf16.mxu0 0
  %83 = vmatpush1.bf16.msra.mxu0 0
  %84 = vmatprep.subr.bf16.mxu0 0
  %85 = vmatpush1.bf16.msra.mxu0 0
  %86 = vmatprep.subr.bf16.mxu0 0
  %87 = vmatpush1.bf16.msra.mxu0 0
  %88 = vmatprep.subr.bf16.mxu0 0
  %89 = vmatpush1.bf16.msra.mxu0 0
  %90 = vmatprep.mubr.bf16.mxu0 0
  %91 = vmatmul.mubr.bf16.gmra.mrb[0].mxu0 %v56
  %v92 = vpop.f32.mrb[0].mxu0
  %v93 = vadd.f32 %v40, %v92
  %v94 = vpop.f32.mrb[0].mxu0
  %v95 = vpop.f32.mrb[0].mxu0
  %v96 = vpop.f32.mrb[0].mxu0
  %97 = vdwg.mxu0
  %v98 = vmax.f32 %v93, 0.0
  %v99 = vld [vmem:[%s3] sm:$0xff]
  %v100 = vld [vmem:[%s3 + $0x8] sm:$0xff]
  %v101 = vld [vmem:[%s3 + $0x10] sm:$0xff]
  %v102 = vld [vmem:[%s3 + $0x18] sm:$0xff]
  %v103 = vld [vmem:[%s3 + $0x20] sm:$0xff]
  %v104 = vld [vmem:[%s3 + $0x28] sm:$0xff]
  %v105 = vld [vmem:[%s3 + $0x30] sm:$0xff]
  %v106 = vld [vmem:[%s3 + $0x38] sm:$0xff]
  %v107 = vld [vmem:[%s4] sm:$0x1]
  %v109 = vlaneseq
  %v110 = vshrl.u32 %v109, 7
  %v111 = vsub.s32 0, %v110
  %v112 = vrot.slane %v107, %v111
  %vm114 = vcmask 523264
  %v116 = vsel %vm114, %v98, 0
  %118 = vmatprep.subr.mxu0 0.0
  %119 = vmatpush1.msra.mxu0 %v99
  %120 = vmatprep.subr.mxu0 0.0
  %121 = vmatpush1.msra.mxu0 %v100
  %122 = vmatprep.subr.mxu0 0.0
  %123 = vmatpush1.msra.mxu0 %v101
  %124 = vmatprep.subr.mxu0 0.0
  %125 = vmatpush1.msra.mxu0 %v102
  %126 = vmatprep.subr.mxu0 0.0
  %127 = vmatpush1.msra.mxu0 %v103
  %128 = vmatprep.subr.mxu0 0.0
  %129 = vmatpush1.msra.mxu0 %v104
  %130 = vmatprep.subr.mxu0 0.0
  %131 = vmatpush1.msra.mxu0 %v105
  %132 = vmatprep.subr.mxu0 0.0
  %133 = vmatpush1.msra.mxu0 %v106
  %134 = vmatprep.subr.mxu0 0.0
  %135 = vmatpush1.msra.mxu0 0.0
  %136 = vmatprep.subr.mxu0 0.0
  %137 = vmatpush1.msra.mxu0 0.0
  %138 = vmatprep.subr.mxu0 0.0
  %139 = vmatpush1.msra.mxu0 0.0
  %140 = vmatprep.subr.mxu0 0.0
  %141 = vmatpush1.msra.mxu0 0.0
  %142 = vmatprep.subr.mxu0 0.0
  %143 = vmatpush1.msra.mxu0 0.0
  %144 = vmatprep.subr.mxu0 0.0
  %145 = vmatpush1.msra.mxu0 0.0
  %146 = vmatprep.subr.mxu0 0.0
  %147 = vmatpush1.msra.mxu0 0.0
  %148 = vmatprep.subr.mxu0 0.0
  %149 = vmatpush1.msra.mxu0 0.0
  %150 = vmatprep.subr.mxu0 0.0
  %151 = vmatpush1.msra.mxu0 0.0
  %152 = vmatprep.subr.mxu0 0.0
  %153 = vmatpush1.msra.mxu0 0.0
  %154 = vmatprep.subr.mxu0 0.0
  %155 = vmatpush1.msra.mxu0 0.0
  %156 = vmatprep.subr.mxu0 0.0
  %157 = vmatpush1.msra.mxu0 0.0
  %158 = vmatprep.subr.mxu0 0.0
  %159 = vmatpush1.msra.mxu0 0.0
  %160 = vmatprep.subr.mxu0 0.0
  %161 = vmatpush1.msra.mxu0 0.0
  %162 = vmatprep.subr.mxu0 0.0
  %163 = vmatpush1.msra.mxu0 0.0
  %164 = vmatprep.subr.mxu0 0.0
  %165 = vmatpush1.msra.mxu0 0.0
  %166 = vmatprep.subr.mxu0 0.0
  %167 = vmatpush1.msra.mxu0 0.0
  %168 = vmatprep.subr.mxu0 0.0
  %169 = vmatpush1.msra.mxu0 0.0
  %170 = vmatprep.subr.mxu0 0.0
  %171 = vmatpush1.msra.mxu0 0.0
  %172 = vmatprep.subr.mxu0 0.0
  %173 = vmatpush1.msra.mxu0 0.0
  %174 = vmatprep.subr.mxu0 0.0
  %175 = vmatpush1.msra.mxu0 0.0
  %176 = vmatprep.subr.mxu0 0.0
  %177 = vmatpush1.msra.mxu0 0.0
  %178 = vmatprep.subr.mxu0 0.0
  %179 = vmatpush1.msra.mxu0 0.0
  %180 = vmatprep.subr.mxu0 0.0
  %181 = vmatpush1.msra.mxu0 0.0
  %182 = vmatprep.mubr.f32.mxu0 0.0
  %183 = vmatmul.mubr.f32.gmra.mrb[0].mxu0 %v116
  %v184 = vpop.f32.mrb[0].mxu0
  %v185 = vadd.f32 %v112, %v184
  %v186 = vpop.f32.mrb[0].mxu0
  %187 = vdwg.mxu0
  %v188 = vmax.f32 %v185, 0.0
  %v189 = vld [vmem:[%s5] sm:$0x1]
  %v191 = vlaneseq
  %v192 = vshrl.u32 %v191, 7
  %v193 = vsub.s32 0, %v192
  %v194 = vrot.slane %v189, %v193
  %v196 = vmul.f32 %v188, %v194
  %v197 = vsel %vm54, %v196, 0.0
  %198 = vadd.xlane.f32.xlu0 %v197
  %v199 = vpop.xlane.xlu0 %198
  %v200 = vld [vmem:[#allocation2] sm:$0x1]
  %v202 = vlaneseq
  %v203 = vshrl.u32 %v202, 7
  %v204 = vsub.s32 0, %v203
  %v205 = vrot.slane %v200, %v204
  %v207 = vadd.f32 %v199, %v205
  %v208 = vsub.f32 0.0, %v207
  %v209 = vmul.f32 %v208, 1.442695
  %v210 = vpow.pop %v209
  %v211 = vadd.f32 %v210, 1.0
  %v212 = vrcp.pop %v211
  %vm213 = vcmask 7168
  %214 = vst.msk [vmem:[%s7] sm:$0xff] %vm213, %v212
  // Predicated region
  $region30: #{tpu_custom_call.1} parent=0 // pred_check
    _
  $region31: #{tpu_custom_call.1} parent=0 // pred_check_branch
    %216 = sbr.rel (0) target = $region33
  $region32: #{tpu_custom_call.1} parent=0 // pred_region
    _
  $region33: #{tpu_custom_call.1} parent=0 // pred_fallthru
    _
  // Predicated region
  $region34: #{tpu_custom_call.1} parent=0 // pred_check
    _
  $region35: #{tpu_custom_call.1} parent=0 // pred_check_branch
    %218 = sbr.rel (0) target = $region37
  $region36: #{tpu_custom_call.1} parent=0 // pred_region
    _
  $region37: #{tpu_custom_call.1} parent=0 // pred_fallthru
    _

// kernel: tpu_custom_call.1
$region0: #{tpu_custom_call.1}
  #allocation0 [shape = 'u32[]', space=smem, size = 0x4, offset = 0x4, fixed_abs, tag = 'smem constant byte address 0x4 - core index']
  #allocation1 [shape = 'u32[144,128]{1,0:T(1,128)}', space=vmem, size = 0x12000, scoped, tag = 'internal scratch']
  #allocation2 [shape = 'f32[1,1]{1,0:T(1,128)S(1)}', space=vmem, size = 0x200, scoped, tag = 'scoped memory for tpu_custom_call.1']
  %s0 = inlined_call_operand.vmem [shape: f32[8,32], index: 0, kind: input, shape index: {}]
  %s1 = inlined_call_operand.vmem [shape: bf16[32,64], index: 1, kind: input, shape index: {}]
  %s2 = inlined_call_operand.vmem [shape: f32[1,64], index: 2, kind: input, shape index: {}]
  %s3 = inlined_call_operand.vmem [shape: f32[64,32], index: 3, kind: input, shape index: {}]
  %s4 = inlined_call_operand.vmem [shape: f32[1,32], index: 4, kind: input, shape index: {}]
  %s5 = inlined_call_operand.vmem [shape: f32[1,32], index: 5, kind: input, shape index: {}]
  %s6 = inlined_call_operand.<no memory space> [shape: f32[1,1], index: 6, kind: input, shape index: {}]
  %s7 = inlined_call_operand.vmem [shape: f32[8,1], index: 7, kind: output, shape index: {}]
  %s8 = sld [smem:[#allocation0]]
  $region38: #{tpu_custom_call.1} parent=0
    _
  %s10 = ssub.s32 1, %s8
  %s11 = scalar_select 0, %s10, %s8
  %v12 = vstv %s6
  %13 = vst [vmem:[#allocation2] sm:$0x1] %v12
  // Predicated region
  $region2: #{tpu_custom_call.1} parent=0 // pred_check
    _
  $region3: #{tpu_custom_call.1} parent=0 // pred_check_branch
    %15 = sbr.rel (0) target = $region5
  $region4: #{tpu_custom_call.1} parent=0 // pred_region
    _
  $region5: #{tpu_custom_call.1} parent=0 // pred_fallthru
    _
  // Predicated region
  $region6: #{tpu_custom_call.1} parent=0 // pred_check
    _
  $region7: #{tpu_custom_call.1} parent=0 // pred_check_branch
    %17 = sbr.rel (0) target = $region9
  $region8: #{tpu_custom_call.1} parent=0 // pred_region
    _
  $region9: #{tpu_custom_call.1} parent=0 // pred_fallthru
    _
  // Predicated region
  $region10: #{tpu_custom_call.1} parent=0 // pred_check
    _
  $region11: #{tpu_custom_call.1} parent=0 // pred_check_branch
    %19 = sbr.rel (0) target = $region13
  $region12: #{tpu_custom_call.1} parent=0 // pred_region
    _
  $region13: #{tpu_custom_call.1} parent=0 // pred_fallthru
    _
  // Predicated region
  $region14: #{tpu_custom_call.1} parent=0 // pred_check
    _
  $region15: #{tpu_custom_call.1} parent=0 // pred_check_branch
    %21 = sbr.rel (0) target = $region17
  $region16: #{tpu_custom_call.1} parent=0 // pred_region
    _
  $region17: #{tpu_custom_call.1} parent=0 // pred_fallthru
    _
  // Predicated region
  $region18: #{tpu_custom_call.1} parent=0 // pred_check
    _
  $region19: #{tpu_custom_call.1} parent=0 // pred_check_branch
    %23 = sbr.rel (0) target = $region21
  $region20: #{tpu_custom_call.1} parent=0 // pred_region
    _
  $region21: #{tpu_custom_call.1} parent=0 // pred_fallthru
    _
  // Predicated region
  $region22: #{tpu_custom_call.1} parent=0 // pred_check
    _
  $region23: #{tpu_custom_call.1} parent=0 // pred_check_branch
    %25 = sbr.rel (0) target = $region25
  $region24: #{tpu_custom_call.1} parent=0 // pred_region
    _
  $region25: #{tpu_custom_call.1} parent=0 // pred_fallthru
    _
  // Predicated region
  $region26: #{tpu_custom_call.1} parent=0 // pred_check
    _
  $region27: #{tpu_custom_call.1} parent=0 // pred_check_branch
    %27 = sbr.rel (0) target = $region29
  $region28: #{tpu_custom_call.1} parent=0 // pred_region
    _
  $region29: #{tpu_custom_call.1} parent=0 // pred_fallthru
    _
  %v29 = vld [vmem:[%s0] sm:$0xff]
  %v30 = vpack.c.bf16 %v29, %v29
  %v31 = vld [vmem:[%s1] sm:$0xf]
  %v32 = vld [vmem:[%s1 + $0x4] sm:$0xf]
  %v33 = vld [vmem:[%s1 + $0x8] sm:$0xf]
  %v34 = vld [vmem:[%s1 + $0xc] sm:$0xf]
  %v35 = vld [vmem:[%s2] sm:$0x1]
  %v37 = vlaneseq
  %v38 = vshrl.u32 %v37, 7
  %v39 = vsub.s32 0, %v38
  %v40 = vrot.slane %v35, %v39
  %v46 = vunpack.c.l.b16 %v31
  %v47 = vunpack.c.l.b16 %v32
  %v48 = vunpack.c.l.b16 %v33
  %v49 = vunpack.c.l.b16 %v34
  %v50 = vpack.c.b16 %v47, %v46
  %v51 = vpack.c.b16 %v49, %v48
  %vm54 = vcmask 261120
  %v56 = vsel %vm54, %v30, 0
  %58 = vmatprep.subr.bf16.mxu0 0
  %59 = vmatpush1.bf16.msra.mxu0 %v50
  %60 = vmatprep.subr.bf16.mxu0 0
  %61 = vmatpush1.bf16.msra.mxu0 %v51
  %62 = vmatprep.subr.bf16.mxu0 0
  %63 = vmatpush1.bf16.msra.mxu0 0
  %64 = vmatprep.subr.bf16.mxu0 0
  %65 = vmatpush1.bf16.msra.mxu0 0
  %66 = vmatprep.subr.bf16.mxu0 0
  %67 = vmatpush1.bf16.msra.mxu0 0
  %68 = vmatprep.subr.bf16.mxu0 0
  %69 = vmatpush1.bf16.msra.mxu0 0
  %70 = vmatprep.subr.bf16.mxu0 0
  %71 = vmatpush1.bf16.msra.mxu0 0
  %72 = vmatprep.subr.bf16.mxu0 0
  %73 = vmatpush1.bf16.msra.mxu0 0
  %74 = vmatprep.subr.bf16.mxu0 0
  %75 = vmatpush1.bf16.msra.mxu0 0
  %76 = vmatprep.subr.bf16.mxu0 0
  %77 = vmatpush1.bf16.msra.mxu0 0
  %78 = vmatprep.subr.bf16.mxu0 0
  %79 = vmatpush1.bf16.msra.mxu0 0
  %80 = vmatprep.subr.bf16.mxu0 0
  %81 = vmatpush1.bf16.msra.mxu0 0
  %82 = vmatprep.subr.bf16.mxu0 0
  %83 = vmatpush1.bf16.msra.mxu0 0
  %84 = vmatprep.subr.bf16.mxu0 0
  %85 = vmatpush1.bf16.msra.mxu0 0
  %86 = vmatprep.subr.bf16.mxu0 0
  %87 = vmatpush1.bf16.msra.mxu0 0
  %88 = vmatprep.subr.bf16.mxu0 0
  %89 = vmatpush1.bf16.msra.mxu0 0
  %90 = vmatprep.mubr.bf16.mxu0 0
  %91 = vmatmul.mubr.bf16.gmra.mrb[0].mxu0 %v56
  %v92 = vpop.f32.mrb[0].mxu0
  %v93 = vadd.f32 %v40, %v92
  %v94 = vpop.f32.mrb[0].mxu0
  %v95 = vpop.f32.mrb[0].mxu0
  %v96 = vpop.f32.mrb[0].mxu0
  %97 = vdwg.mxu0
  %v98 = vmax.f32 %v93, 0.0
  %v99 = vld [vmem:[%s3] sm:$0xff]
  %v100 = vld [vmem:[%s3 + $0x8] sm:$0xff]
  %v101 = vld [vmem:[%s3 + $0x10] sm:$0xff]
  %v102 = vld [vmem:[%s3 + $0x18] sm:$0xff]
  %v103 = vld [vmem:[%s3 + $0x20] sm:$0xff]
  %v104 = vld [vmem:[%s3 + $0x28] sm:$0xff]
  %v105 = vld [vmem:[%s3 + $0x30] sm:$0xff]
  %v106 = vld [vmem:[%s3 + $0x38] sm:$0xff]
  %v107 = vld [vmem:[%s4] sm:$0x1]
  %v109 = vlaneseq
  %v110 = vshrl.u32 %v109, 7
  %v111 = vsub.s32 0, %v110
  %v112 = vrot.slane %v107, %v111
  %vm114 = vcmask 523264
  %v116 = vsel %vm114, %v98, 0
  %118 = vmatprep.subr.mxu0 0.0
  %119 = vmatpush1.msra.mxu0 %v99
  %120 = vmatprep.subr.mxu0 0.0
  %121 = vmatpush1.msra.mxu0 %v100
  %122 = vmatprep.subr.mxu0 0.0
  %123 = vmatpush1.msra.mxu0 %v101
  %124 = vmatprep.subr.mxu0 0.0
  %125 = vmatpush1.msra.mxu0 %v102
  %126 = vmatprep.subr.mxu0 0.0
  %127 = vmatpush1.msra.mxu0 %v103
  %128 = vmatprep.subr.mxu0 0.0
  %129 = vmatpush1.msra.mxu0 %v104
  %130 = vmatprep.subr.mxu0 0.0
  %131 = vmatpush1.msra.mxu0 %v105
  %132 = vmatprep.subr.mxu0 0.0
  %133 = vmatpush1.msra.mxu0 %v106
  %134 = vmatprep.subr.mxu0 0.0
  %135 = vmatpush1.msra.mxu0 0.0
  %136 = vmatprep.subr.mxu0 0.0
  %137 = vmatpush1.msra.mxu0 0.0
  %138 = vmatprep.subr.mxu0 0.0
  %139 = vmatpush1.msra.mxu0 0.0
  %140 = vmatprep.subr.mxu0 0.0
  %141 = vmatpush1.msra.mxu0 0.0
  %142 = vmatprep.subr.mxu0 0.0
  %143 = vmatpush1.msra.mxu0 0.0
  %144 = vmatprep.subr.mxu0 0.0
  %145 = vmatpush1.msra.mxu0 0.0
  %146 = vmatprep.subr.mxu0 0.0
  %147 = vmatpush1.msra.mxu0 0.0
  %148 = vmatprep.subr.mxu0 0.0
  %149 = vmatpush1.msra.mxu0 0.0
  %150 = vmatprep.subr.mxu0 0.0
  %151 = vmatpush1.msra.mxu0 0.0
  %152 = vmatprep.subr.mxu0 0.0
  %153 = vmatpush1.msra.mxu0 0.0
  %154 = vmatprep.subr.mxu0 0.0
  %155 = vmatpush1.msra.mxu0 0.0
  %156 = vmatprep.subr.mxu0 0.0
  %157 = vmatpush1.msra.mxu0 0.0
  %158 = vmatprep.subr.mxu0 0.0
  %159 = vmatpush1.msra.mxu0 0.0
  %160 = vmatprep.subr.mxu0 0.0
  %161 = vmatpush1.msra.mxu0 0.0
  %162 = vmatprep.subr.mxu0 0.0
  %163 = vmatpush1.msra.mxu0 0.0
  %164 = vmatprep.subr.mxu0 0.0
  %165 = vmatpush1.msra.mxu0 0.0
  %166 = vmatprep.subr.mxu0 0.0
  %167 = vmatpush1.msra.mxu0 0.0
  %168 = vmatprep.subr.mxu0 0.0
  %169 = vmatpush1.msra.mxu0 0.0
  %170 = vmatprep.subr.mxu0 0.0
  %171 = vmatpush1.msra.mxu0 0.0
  %172 = vmatprep.subr.mxu0 0.0
  %173 = vmatpush1.msra.mxu0 0.0
  %174 = vmatprep.subr.mxu0 0.0
  %175 = vmatpush1.msra.mxu0 0.0
  %176 = vmatprep.subr.mxu0 0.0
  %177 = vmatpush1.msra.mxu0 0.0
  %178 = vmatprep.subr.mxu0 0.0
  %179 = vmatpush1.msra.mxu0 0.0
  %180 = vmatprep.subr.mxu0 0.0
  %181 = vmatpush1.msra.mxu0 0.0
  %182 = vmatprep.mubr.f32.mxu0 0.0
  %183 = vmatmul.mubr.f32.gmra.mrb[0].mxu0 %v116
  %v184 = vpop.f32.mrb[0].mxu0
  %v185 = vadd.f32 %v112, %v184
  %v186 = vpop.f32.mrb[0].mxu0
  %187 = vdwg.mxu0
  %v188 = vmax.f32 %v185, 0.0
  %v189 = vld [vmem:[%s5] sm:$0x1]
  %v191 = vlaneseq
  %v192 = vshrl.u32 %v191, 7
  %v193 = vsub.s32 0, %v192
  %v194 = vrot.slane %v189, %v193
  %v196 = vmul.f32 %v188, %v194
  %v197 = vsel %vm54, %v196, 0.0
  %198 = vadd.xlane.f32.xlu0 %v197
  %v199 = vpop.xlane.xlu0 %198
  %v200 = vld [vmem:[#allocation2] sm:$0x1]
  %v202 = vlaneseq
  %v203 = vshrl.u32 %v202, 7
  %v204 = vsub.s32 0, %v203
  %v205 = vrot.slane %v200, %v204
  %v207 = vadd.f32 %v199, %v205
  %v208 = vsub.f32 0.0, %v207
  %v209 = vmul.f32 %v208, 1.442695
  %v210 = vpow.pop %v209
  %v211 = vadd.f32 %v210, 1.0
  %v212 = vrcp.pop %v211
  %vm213 = vcmask 7168
  %214 = vst.msk [vmem:[%s7] sm:$0xff] %vm213, %v212
  // Predicated region
  $region30: #{tpu_custom_call.1} parent=0 // pred_check
    _
  $region31: #{tpu_custom_call.1} parent=0 // pred_check_branch
    %216 = sbr.rel (0) target = $region33
  $region32: #{tpu_custom_call.1} parent=0 // pred_region
    _
  $region33: #{tpu_custom_call.1} parent=0 // pred_fallthru
    _
  // Predicated region
  $region34: #{tpu_custom_call.1} parent=0 // pred_check
    _
  $region35: #{tpu_custom_call.1} parent=0 // pred_check_branch
    %218 = sbr.rel (0) target = $region37
  $region36: #{tpu_custom_call.1} parent=0 // pred_region
    _
  $region37: #{tpu_custom_call.1} parent=0 // pred_fallthru
    _

</llo_original>
